<compile_context>
chip_gen: v6e
topology: v6e:2x2x1
jax: 0.10.0
libtpu: 0.0.40
codegen_flags: <defaults>
</compile_context>

<pallas_src>
import jax
import jax.numpy as jnp
from jax.experimental import pallas as pl
from jax.experimental.pallas import tpu as pltpu


_LANE = 128                       # lane-dense output: unmasked full-lane stores
_MAX_TILE_BYTES = 4 * 1024 * 1024  # 4 MiB per input tile (x2 double-buffer, x2 in+out)


def linear_kernel(x_ref, params_ref, o_ref):
    # x_ref: (block_rows, 128) VMEM tile; params_ref: (2,) f32 in SMEM = [w, b].
    w = params_ref[0]
    b = params_ref[1]
    o_ref[...] = (x_ref[...].astype(jnp.float32) * w + b).astype(o_ref.dtype)


def _round_up(x, m):
    return -(-x // m) * m


def _sublane_multiple(dtype):
    return {4: 8, 2: 16, 1: 32}.get(jnp.dtype(dtype).itemsize, 8)


def linear_regression(x, weight, bias, *, min_pallas_elems=16384):
    """x: [N, 1], weight: [1, 1] (PyTorch layout [out, in]), bias: [1]."""
    n, in_f = x.shape
    assert in_f == 1 and weight.shape == (1, 1) and bias.shape == (1,)
    out_dtype = x.dtype
    w = weight.astype(jnp.float32).reshape(())
    b = bias.astype(jnp.float32).reshape(())

    # Tiny-N fast path: at these sizes the pallas_call is 100% launch/DMA overhead.
    if n < min_pallas_elems:
        return (x.astype(jnp.float32) * w + b).astype(out_dtype)

    params = jnp.stack([w, b])  # (2,) f32 scalars -> SMEM (scalar path)

    flat = x.reshape(-1)                        # free bitcast reshape
    rem = n % _LANE
    padded = n if rem == 0 else n + (_LANE - rem)
    if rem != 0:
        # Ragged tail fallback: costs one pad + one slice pass over HBM. The
        # common N % 128 == 0 case pays zero extra traffic.
        flat = jnp.pad(flat, (0, padded - n))
    rows = padded // _LANE
    x2d = flat.reshape(rows, _LANE)             # bitcast when rem == 0

    sub = _sublane_multiple(out_dtype)
    itemsize = jnp.dtype(out_dtype).itemsize
    max_block_rows = max(sub, _MAX_TILE_BYTES // (_LANE * itemsize))
    if rows <= sub:
        block_rows = rows  # block equals full dim (allowed even below sublane multiple)
    else:
        # Keep grid >= 2 (both v7x TensorCores busy) while capping at ~4 MiB tiles.
        half = _round_up(-(-rows // 2), sub)
        block_rows = max(sub, min(max_block_rows, half))

    grid = (pl.cdiv(rows, block_rows),)         # ragged last row-block is masked

    out2d = pl.pallas_call(
        linear_kernel,
        out_shape=jax.ShapeDtypeStruct((rows, _LANE), out_dtype),
        grid=grid,
        in_specs=[
            pl.BlockSpec((block_rows, _LANE), lambda i: (i, 0)),
            pl.BlockSpec(memory_space=pltpu.MemorySpace.SMEM),
        ],
        out_specs=pl.BlockSpec((block_rows, _LANE), lambda i: (i, 0)),
        compiler_params=pltpu.CompilerParams(
            dimension_semantics=("parallel",),
            # 16 MiB of double-buffered in+out tiles: above v5e's 16 MiB scoped
            # default, so raise it explicitly; 48 MiB is still under v7x's 64 MiB
            # physical VMEM.
            vmem_limit_bytes=48 << 20,
        ),
    )(x2d, params)

    out_flat = out2d.reshape(-1)
    if rem != 0:
        out_flat = out_flat[:n]
    return out_flat.reshape(n, 1)


if __name__ == "__main__":
    key = jax.random.PRNGKey(0)
    kx, kw, kb = jax.random.split(key, 3)

    # Deterministic parameters (mimics nn.Linear(1, 1) uniform init bound).
    weight = jax.random.uniform(kw, (1, 1), dtype=jnp.float32, minval=-1.0, maxval=1.0)
    bias = jax.random.uniform(kb, (1,), dtype=jnp.float32, minval=-1.0, maxval=1.0)

    def ref(x):
        return x @ weight.T + bias  # same math as PyTorch x @ W^T + b

    # 1) Small input consistent with nn.Linear(1, 1): batch of 8 scalar samples
    #    (goes through the tiny-N plain-JAX fast path).
    x_small = jax.random.normal(kx, (8, 1), dtype=jnp.float32)
    out_small = jax.block_until_ready(linear_regression(x_small, weight, bias))
    assert out_small.shape == (8, 1)
    assert jnp.allclose(out_small, ref(x_small), atol=1e-6), "mismatch (small)"

    # 2) Force the Pallas kernel on a lane-aligned batch: no pad/slice, grid of 2
    #    row-tiles, ordinary full blocks.
    x_aligned = jax.random.normal(kx, (4096, 1), dtype=jnp.float32)
    out_aligned = jax.block_until_ready(
        linear_regression(x_aligned, weight, bias, min_pallas_elems=0))
    assert out_aligned.shape == (4096, 1)
    assert jnp.allclose(out_aligned, ref(x_aligned), atol=1e-6), "mismatch (aligned)"

    # 3) Force the Pallas kernel on a ragged batch: exercises the padded fallback
    #    and the masked ragged final row-block.
    x_ragged = jax.random.normal(kx, (4103, 1), dtype=jnp.float32)
    out_ragged = jax.block_until_ready(
        linear_regression(x_ragged, weight, bias, min_pallas_elems=0))
    assert out_ragged.shape == (4103, 1)
    assert jnp.allclose(out_ragged, ref(x_ragged), atol=1e-6), "mismatch (ragged)"

    print("KERNEL_OK")
</pallas_src>

<mosaic_0001>
module attributes {stable_mosaic.version = 11 : i64} {
  func.func @linear_kernel(%arg0: i32, %arg1: memref<16x128xf32, #tpu.memory_space<vmem>>, %arg2: memref<2xf32, #tpu.memory_space<smem>>, %arg3: memref<16x128xf32, #tpu.memory_space<vmem>>) attributes {dimension_semantics = [#tpu.dimension_semantics<parallel>], iteration_bounds = array<i64: 2>, scalar_prefetch = 0 : i64, scratch_operands = 0 : i64, tpu.core_type = #tpu.core_type<tc>, window_params = [{transform_indices = @transform_0, window_bounds = array<i64: 16, 128>}, {transform_indices = @transform_1, window_bounds = array<i64: 2>}, {transform_indices = @transform_2, window_bounds = array<i64: 16, 128>}]} {
    %c0 = arith.constant 0 : index
    %0 = memref.load %arg2[%c0] : memref<2xf32, #tpu.memory_space<smem>>
    %c1 = arith.constant 1 : index
    %1 = memref.load %arg2[%c1] : memref<2xf32, #tpu.memory_space<smem>>
    %c0_0 = arith.constant 0 : index
    %c0_1 = arith.constant 0 : index
    %2 = vector.load %arg1[%c0_0, %c0_1] : memref<16x128xf32, #tpu.memory_space<vmem>>, vector<16x128xf32>
    %3 = vector.broadcast %0 : f32 to vector<16x128xf32>
    %4 = arith.mulf %2, %3 : vector<16x128xf32>
    %5 = vector.broadcast %1 : f32 to vector<16x128xf32>
    %6 = arith.addf %4, %5 : vector<16x128xf32>
    %c0_2 = arith.constant 0 : index
    %c0_3 = arith.constant 0 : index
    %7 = vector.load %arg3[%c0_2, %c0_3] : memref<16x128xf32, #tpu.memory_space<vmem>>, vector<16x128xf32>
    tpu.vector_store %arg3[%c0_2, %c0_3], %6 {strides = array<i32>} : memref<16x128xf32, #tpu.memory_space<vmem>>, vector<16x128xf32>,
    return
  }
  func.func @transform_0(%arg0: i32) -> (i32, i32) {
    %c0_i32 = arith.constant 0 : i32
    %c0_i32_0 = arith.constant 0 : i32
    return %arg0, %c0_i32 : i32, i32
  }
  func.func @transform_1(%arg0: i32) -> i32 {
    %c0_i32 = arith.constant 0 : i32
    %c0_i32_0 = arith.constant 0 : i32
    return %c0_i32 : i32
  }
  func.func @transform_2(%arg0: i32) -> (i32, i32) {
    %c0_i32 = arith.constant 0 : i32
    %c0_i32_0 = arith.constant 0 : i32
    return %arg0, %c0_i32 : i32, i32
  }
}

</mosaic_0001>

<llo_original>
// kernel: tpu_custom_call.1
$region0: #{tpu_custom_call.1}
  #allocation0 [shape = 'u32[]', space=smem, size = 0x4, offset = 0x4, fixed_abs, tag = 'smem constant byte address 0x4 - core index']
  #allocation1 [shape = 'u32[144,128]{1,0:T(1,128)}', space=vmem, size = 0x12000, scoped, tag = 'internal scratch']
  %s0 = inlined_call_operand.hbm [shape: f32[32,128], index: 0, kind: input, shape index: {}]
  %s1 = inlined_call_operand.vmem [shape: f32[2], index: 1, kind: input, shape index: {}]
  %s2 = inlined_call_operand.hbm [shape: f32[32,128], index: 2, kind: output, shape index: {}]
  %s3 = sld [smem:[#allocation0]]
  $region49: #{tpu_custom_call.1} parent=0
    _
  %s5 = ssub.s32 1, %s3
  %s6 = scalar_select 0, %s5, %s3
  $region1: #{tpu_custom_call.1} parent=0
    #allocation2 [shape = 'u8[16384]{0}', space=vmem, size = 0x4000, scoped, tag = 'input window, operand 0']
    #allocation3 [shape = 's32[2]{0}', space=sflag, size = 0x8, scoped, tag = 'scoped memory for tpu_custom_call.1']
    #allocation4 [shape = 's32[2]{0}', space=sflag, size = 0x8, scoped, tag = 'scoped memory for tpu_custom_call.1']
    #allocation5 [shape = 's32[2]{0}', space=sflag, size = 0x8, scoped, tag = 'scoped memory for tpu_custom_call.1']
    #allocation6 [shape = 'u8[512]{0}', space=smem, size = 0x200, scoped, tag = 'input window, operand 1, single buffered']
    #allocation7 [shape = 'u8[16384]{0}', space=vmem, size = 0x4000, scoped, tag = 'output window, operand 0']
    %7 = vsyncpa [#allocation3], 0
    %s8 = scalar_lea.sflag [#allocation3], 1
    %9 = vsyncpa %s8, 0
    %10 = vsyncpa [#allocation5], 0
    %11 = vsyncpa [#allocation4], 0
    %s12 = scalar_lea.sflag [#allocation4], 1
    %13 = vsyncpa %s12, 0
    loop: start=0, step=1, limit=4
    $region2: #{tpu_custom_call.1} parent=1 // loop_pre_header
      _
    $region3: #{tpu_custom_call.1} parent=1 // loop_header
      %s15 = sphi 0, %s19
      %p16 = scmp.ge.s32.totalorder %s15, 4
      %s25 = sphi 0, %s27
      %s28 = sphi 0, %s25
      %s29 = sphi 0, %s28
      %s45 = sphi 0, %s29
      %s49 = sphi 0, %s49
      %s51 = sphi 0, %s49
      %s52 = sphi 0, %s51
      %s66 = sphi 0, %s52
      %s72 = sphi 0, %s74
      %s75 = sphi 0, %s72
      %s76 = sphi 0, %s75
      %s92 = sphi 0, %s76
    $region4: #{tpu_custom_call.1} parent=1 // loop_header_branch
      %18 = sbr.rel (%p16) target = $region8
    $region5: #{tpu_custom_call.1} parent=1 // loop_body
      %s20 = ssub.s32 %s15, 1
      %s21 = ssub.s32 %s15, 2
      %s22 = sadd.s32 %s15, 1
      %s23 = ssub.s32 %s15, %s22
      %p24 = scmp.eq.s32.totalorder %s23, 0
      %s26 = sadd.s32 %s25, 1
      %s27 = scalar_select %p24, %s25, %s26
      %p30 = pneg %p24
      %p31 = scmp.eq.s32.totalorder %s15, 1
      %p32 = por %p30, %p31
      %p33 = scmp.ne.s32.totalorder %s25, %s28
      %p34 = scmp.eq.s32.totalorder %s15, 0
      %p35 = por %p33, %p34
      %p36 = scmp.ne.s32.totalorder %s25, %s28
      %p37 = scmp.eq.s32.totalorder %s20, 1
      %p38 = por %p36, %p37
      %p39 = scmp.ne.s32.totalorder %s28, %s29
      %p40 = scmp.eq.s32.totalorder %s20, 0
      %p41 = por %p39, %p40
      %p42 = scmp.ne.s32.totalorder %s28, %s29
      %p43 = scmp.eq.s32.totalorder %s21, 1
      %p44 = por %p42, %p43
      %p46 = scmp.ne.s32.totalorder %s29, %s45
      %p47 = scmp.eq.s32.totalorder %s21, 0
      %p48 = por %p46, %p47
      %s50 = sadd.s32 %s49, 1
      %p53 = scmp.eq.s32.totalorder %s15, 1
      %p54 = scmp.ne.s32.totalorder %s49, %s51
      %p55 = scmp.eq.s32.totalorder %s15, 0
      %p56 = por %p54, %p55
      %p57 = scmp.ne.s32.totalorder %s49, %s51
      %p58 = scmp.eq.s32.totalorder %s20, 1
      %p59 = por %p57, %p58
      %p60 = scmp.ne.s32.totalorder %s51, %s52
      %p61 = scmp.eq.s32.totalorder %s20, 0
      %p62 = por %p60, %p61
      %p63 = scmp.ne.s32.totalorder %s51, %s52
      %p64 = scmp.eq.s32.totalorder %s21, 1
      %p65 = por %p63, %p64
      %p67 = scmp.ne.s32.totalorder %s52, %s66
      %p68 = scmp.eq.s32.totalorder %s21, 0
      %p69 = por %p67, %p68
      %s70 = ssub.s32 %s15, %s22
      %p71 = scmp.eq.s32.totalorder %s70, 0
      %s73 = sadd.s32 %s72, 1
      %s74 = scalar_select %p71, %s72, %s73
      %p77 = pneg %p71
      %p78 = scmp.eq.s32.totalorder %s15, 1
      %p79 = por %p77, %p78
      %p80 = scmp.ne.s32.totalorder %s72, %s75
      %p81 = scmp.eq.s32.totalorder %s15, 0
      %p82 = por %p80, %p81
      %p83 = scmp.ne.s32.totalorder %s72, %s75
      %p84 = scmp.eq.s32.totalorder %s20, 1
      %p85 = por %p83, %p84
      %p86 = scmp.ne.s32.totalorder %s75, %s76
      %p87 = scmp.eq.s32.totalorder %s20, 0
      %p88 = por %p86, %p87
      %p89 = scmp.ne.s32.totalorder %s75, %s76
      %p90 = scmp.eq.s32.totalorder %s21, 1
      %p91 = por %p89, %p90
      %p93 = scmp.ne.s32.totalorder %s76, %s92
      %p94 = scmp.eq.s32.totalorder %s21, 0
      %p95 = por %p93, %p94
      %p96 = scmp.le.s32.totalorder 1, %s15
      %p97 = scmp.lt.s32.totalorder %s15, 3
      %p98 = pnand %p96, %p97
      %p99 = pneg %p98
      // Predicated region
      $region9: #{tpu_custom_call.1} parent=5 // pred_check
        _
      $region10: #{tpu_custom_call.1} parent=5 // pred_check_branch
        %101 = sbr.rel (%p98) target = $region12
      $region11: #{tpu_custom_call.1} parent=5 // pred_region
        %s102 = ssub.s32 %s15, 1
        // Predicated region
        $region13: #{tpu_custom_call.1} parent=11 // pred_check
          %p103 = pneg %p62
        $region14: #{tpu_custom_call.1} parent=11 // pred_check_branch
          %105 = sbr.rel (%p103) target = $region16
        $region15: #{tpu_custom_call.1} parent=11 // pred_region
          %s107 = ssub.s32 16, 16
          %108 = vsyncadd [#allocation5], %s107
          %s110 = sshll.u32 %s1, 4
          %s111 = int_to_ptr.vmem [resolvable:$true] %s110
          %113 = dma.vmem_to_smem %s111, 16, [#allocation6], [#allocation5]
        $region16: #{tpu_custom_call.1} parent=11 // pred_fallthru
          _
      $region12: #{tpu_custom_call.1} parent=5 // pred_fallthru
        _
      %p114 = scmp.lt.s32.totalorder %s15, 2
      // Predicated region
      $region17: #{tpu_custom_call.1} parent=5 // pred_check
        %p115 = pneg %p114
      $region18: #{tpu_custom_call.1} parent=5 // pred_check_branch
        %117 = sbr.rel (%p115) target = $region20
      $region19: #{tpu_custom_call.1} parent=5 // pred_region
        // Predicated region
        $region21: #{tpu_custom_call.1} parent=19 // pred_check
          %p118 = pneg %p35
        $region22: #{tpu_custom_call.1} parent=19 // pred_check_branch
          %120 = sbr.rel (%p118) target = $region24
        $region23: #{tpu_custom_call.1} parent=19 // pred_region
          %s121 = sand.u32 %s25, 1
          %s122 = scalar_lea.sflag [#allocation3], %s121
          %s123 = sand.u32 %s25, 1
          %s124 = smul.addr %s123, 16
          %s125 = scalar_lea.vmem [#allocation2], %s124
          %s126 = smul.u32 2, %s15
          %s128 = ssub.s32 256, 256
          %129 = vsyncadd %s122, %s128
          %s130 = smul.addr %s126, 128
          %s131 = scalar_lea.hbm %s0, %s130
          %s132 = sshll.u32 %s125, 4
          %s133 = int_to_ptr.vmem [resolvable:$true] %s132
          %138 = dma.hbm_to_vmem [thread:$0]  %s131, 256, %s133, %s122, 128, 128, 8
        $region24: #{tpu_custom_call.1} parent=19 // pred_fallthru
          _
      $region20: #{tpu_custom_call.1} parent=5 // pred_fallthru
        _
      %p139 = scmp.le.s32.totalorder 1, %s15
      %p140 = scmp.lt.s32.totalorder %s15, 3
      %p141 = pnand %p139, %p140
      %p142 = pneg %p141
      // Predicated region
      $region25: #{tpu_custom_call.1} parent=5 // pred_check
        _
      $region26: #{tpu_custom_call.1} parent=5 // pred_check_branch
        %144 = sbr.rel (%p141) target = $region28
      $region27: #{tpu_custom_call.1} parent=5 // pred_region
        %s145 = ssub.s32 %s15, 1
        %s146 = sand.u32 %s28, 1
        %s147 = scalar_lea.sflag [#allocation3], %s146
        %s148 = sand.u32 %s28, 1
        %s149 = smul.addr %s148, 16
        %s150 = scalar_lea.vmem [#allocation2], %s149
        // Predicated region
        $region29: #{tpu_custom_call.1} parent=27 // pred_check
          %p151 = pneg %p41
        $region30: #{tpu_custom_call.1} parent=27 // pred_check_branch
          %153 = sbr.rel (%p151) target = $region32
        $region31: #{tpu_custom_call.1} parent=27 // pred_region
          %154 = dma.done %s147, 256
        $region32: #{tpu_custom_call.1} parent=27 // pred_fallthru
          _
        // Predicated region
        $region33: #{tpu_custom_call.1} parent=27 // pred_check
          %p155 = pneg %p62
        $region34: #{tpu_custom_call.1} parent=27 // pred_check_branch
          %157 = sbr.rel (%p155) target = $region36
        $region35: #{tpu_custom_call.1} parent=27 // pred_region
          %158 = dma.done [#allocation5], 16
        $region36: #{tpu_custom_call.1} parent=27 // pred_fallthru
          _
        %159 = sfence
        %s160 = sand.u32 %s28, 1
        %s161 = scalar_lea.sflag [#allocation3], %s160
        %s162 = sand.u32 %s28, 1
        %s163 = smul.addr %s162, 16
        %s164 = scalar_lea.vmem [#allocation2], %s163
        %p165 = pneg %p41
        %p166 = pneg %p38
        %p167 = pneg %p62
        %p168 = pneg %p59
        %p169 = pneg %p88
        %p170 = pneg %p85
        %s171 = sand.u32 %s75, 1
        %s172 = scalar_lea.sflag [#allocation4], %s171
        %s173 = sand.u32 %s75, 1
        %s174 = smul.addr %s173, 16
        %s175 = scalar_lea.vmem [#allocation7], %s174
        %s176 = smul.u32 2, %s20
        %s177 = smul.u32 2, %s20
        %s178 = sld [smem:[#allocation6]]
        %s179 = sld [smem:[#allocation6 + $0x1]]
        %v180 = vld [vmem:[%s150] sm:$0xff]
        %v181 = vld [vmem:[%s150 + $0x8] sm:$0xff]
        %v182 = vstv %s178
        %v183 = vmul.f32 %v180, %v182
        %v184 = vmul.f32 %v181, %v182
        %v185 = vstv %s179
        %v186 = vadd.f32 %v183, %v185
        %v187 = vadd.f32 %v184, %v185
        %188 = vst [vmem:[%s175] sm:$0xff] %v186
        %189 = vst [vmem:[%s175 + $0x8] sm:$0xff] %v187
        %s190 = sand.u32 %s75, 1
        %s191 = scalar_lea.sflag [#allocation4], %s190
        %s192 = sand.u32 %s75, 1
        %s193 = smul.addr %s192, 16
        %s194 = scalar_lea.vmem [#allocation7], %s193
        // Predicated region
        $region37: #{tpu_custom_call.1} parent=27 // pred_check
          %p195 = pneg %p85
        $region38: #{tpu_custom_call.1} parent=27 // pred_check_branch
          %197 = sbr.rel (%p195) target = $region40
        $region39: #{tpu_custom_call.1} parent=27 // pred_region
          %s198 = smul.u32 2, %s20
          %s200 = ssub.s32 256, 256
          %201 = vsyncadd %s191, %s200
          %s202 = smul.addr %s198, 128
          %s203 = scalar_lea.hbm %s2, %s202
          %s204 = sshll.u32 %s194, 4
          %s205 = int_to_ptr.vmem [resolvable:$true] %s204
          %210 = dma.vmem_to_hbm [thread:$0]  %s205, 256, %s203, %s191, 128, 128, 8
        $region40: #{tpu_custom_call.1} parent=27 // pred_fallthru
          _
      $region28: #{tpu_custom_call.1} parent=5 // pred_fallthru
        _
      %p211 = scmp.le.s32.totalorder 2, %s15
      // Predicated region
      $region41: #{tpu_custom_call.1} parent=5 // pred_check
        %p212 = pneg %p211
      $region42: #{tpu_custom_call.1} parent=5 // pred_check_branch
        %214 = sbr.rel (%p212) target = $region44
      $region43: #{tpu_custom_call.1} parent=5 // pred_region
        %s215 = ssub.s32 %s15, 2
        // Predicated region
        $region45: #{tpu_custom_call.1} parent=43 // pred_check
          %p216 = pneg %p91
        $region46: #{tpu_custom_call.1} parent=43 // pred_check_branch
          %218 = sbr.rel (%p216) target = $region48
        $region47: #{tpu_custom_call.1} parent=43 // pred_region
          %s219 = sand.u32 %s76, 1
          %s220 = scalar_lea.sflag [#allocation4], %s219
          %s221 = sand.u32 %s76, 1
          %s222 = smul.addr %s221, 16
          %s223 = scalar_lea.vmem [#allocation7], %s222
          %224 = dma.done %s220, 256
        $region48: #{tpu_custom_call.1} parent=43 // pred_fallthru
          _
      $region44: #{tpu_custom_call.1} parent=5 // pred_fallthru
        _
    $region6: #{tpu_custom_call.1} parent=1 // loop_footer
      %s19 = sadd.s32 1, %s15
    $region7: #{tpu_custom_call.1} parent=1 // loop_footer_branch
      %14 = sbr.rel target = $region3
    $region8: #{tpu_custom_call.1} parent=1 // loop_exit
      _
    %225 = vsyncpa [#allocation3], 1
    %s226 = scalar_lea.sflag [#allocation3], 1
    %227 = vsyncpa %s226, 1
    %228 = vsyncpa [#allocation4], 1
    %s229 = scalar_lea.sflag [#allocation4], 1
    %230 = vsyncpa %s229, 1
    %231 = vsyncpa [#allocation5], 1
    %s232 = scalar_lea.sflag [#allocation5], 1
    %233 = vsyncpa %s232, 1

</llo_original>
